<compile_context>
chip_gen: v6e
topology: v6e:2x2x1
jax: 0.10.0
libtpu: 0.0.40
codegen_flags: <defaults>
</compile_context>

<pallas_src>
import jax
import jax.numpy as jnp
from jax.experimental import pallas as pl
from jax.experimental.pallas import tpu as pltpu


def _axis_loss_kernel(feat_ref, ind_ref, tgt_ref, mask_ref, num_ref, pred_acc):
    """Fused gather (one-hot MXU matmul) + masked-L1 reduction.

    Grid: (B, HW // tile_hw); both axes sequential ("arbitrary") because a single scalar
    accumulator is carried across the whole grid.

    feat_ref : (1, C, tile_hw)  feature-map tile of batch b (native dtype, HW on lanes)
    ind_ref  : (1, 1, K)        int32 keypoint indices of batch b (pre-clamped to [0, HW))
    tgt_ref  : (1, C, K)        regression targets of batch b (native dtype)
    mask_ref : (1, 1, K)        float32 validity mask of batch b
    num_ref  : (1, 1) SMEM      running sum_{b,c,k} |pred - tgt| * mask  (single scalar output)
    pred_acc : (C, K) VMEM f32  per-batch gathered-prediction accumulator
    """
    b = pl.program_id(0)
    h = pl.program_id(1)
    last_h = pl.num_programs(1) - 1

    @pl.when(jnp.logical_and(b == 0, h == 0))
    def _():
        num_ref[0, 0] = jnp.float32(0.0)

    @pl.when(h == 0)
    def _():
        pred_acc[...] = jnp.zeros_like(pred_acc)

    k = pred_acc.shape[-1]
    tile_hw = feat_ref.shape[-1]

    # Gather-as-matmul: one-hot (tile_hw, K) built from iota == ind, contracted with the
    # (C, tile_hw) feature tile on the MXU. HIGHEST precision keeps the f32 gather exact.
    pos = jax.lax.broadcasted_iota(jnp.int32, (tile_hw, k), 0) + h * tile_hw
    onehot = (pos == ind_ref[0]).astype(feat_ref.dtype)                  # (tile_hw, K)
    pred_acc[...] += jnp.dot(feat_ref[0], onehot,
                             preferred_element_type=jnp.float32,
                             precision=jax.lax.Precision.HIGHEST)        # (C, K)

    @pl.when(h == last_h)
    def _():
        t = tgt_ref[0].astype(jnp.float32)   # (C, K)
        m = mask_ref[0]                      # (1, K) -> broadcasts over C sublanes
        # |p*m - t*m| == |p - t| * m for a 0/1 float mask.
        num_ref[0, 0] += jnp.sum(jnp.abs(pred_acc[...] - t) * m)


def _pick_hw_tile(hw):
    """Largest lane-dense tile that divides HW; otherwise one full-extent block."""
    for t in (2048, 1024, 512):
        if hw >= t and hw % t == 0:
            return t
    return hw


def axis_loss(output_nchw, mask, ind, target, logi=None):
    """Pallas implementation of AxisLoss.forward(output, mask, ind, target, logi)."""
    B, K = ind.shape

    if logi is None:
        _, C, H, W = output_nchw.shape
        HW = H * W
        # (B, C, H, W) -> (B, C, HW) is a layout-preserving reshape (no HBM copy);
        # the gather itself happens inside the kernel.
        feat = output_nchw.reshape(B, C, HW)
        # Bounds-safe: PyTorch's gather would raise on out-of-range indices; we clamp instead.
        idx = jnp.clip(ind.astype(jnp.int32), 0, HW - 1).reshape(B, 1, K)
    else:
        # pred supplied directly: reuse the same kernel with an identity gather over a
        # "feature map" whose spatial extent is K.
        C = logi.shape[2]
        HW = K
        feat = jnp.swapaxes(logi, 1, 2)                                   # (B, C, K)
        idx = jnp.broadcast_to(jnp.arange(K, dtype=jnp.int32)[None, None, :], (B, 1, K))

    tile_hw = _pick_hw_tile(HW)
    n_hw = HW // tile_hw

    tgt_ck = jnp.swapaxes(target, 1, 2)                                   # (B, C, K)
    mask_f = mask.astype(jnp.float32).reshape(B, 1, K)                    # (B, 1, K)

    grid_spec = pltpu.PrefetchScalarGridSpec(
        num_scalar_prefetch=0,
        grid=(B, n_hw),
        in_specs=[
            pl.BlockSpec((1, C, tile_hw), lambda b, h: (b, 0, h)),        # feature-map tile
            pl.BlockSpec((1, 1, K), lambda b, h: (b, 0, 0)),              # indices
            pl.BlockSpec((1, C, K), lambda b, h: (b, 0, 0)),              # targets
            pl.BlockSpec((1, 1, K), lambda b, h: (b, 0, 0)),              # mask
        ],
        out_specs=pl.BlockSpec(memory_space=pltpu.MemorySpace.SMEM),      # single scalar numerator
        scratch_shapes=[pltpu.VMEM((C, K), jnp.float32)],                 # per-batch pred accumulator
    )

    num = pl.pallas_call(
        _axis_loss_kernel,
        out_shape=jax.ShapeDtypeStruct((1, 1), jnp.float32),
        grid_spec=grid_spec,
        compiler_params=pltpu.CompilerParams(
            # The single-scalar accumulator is carried across both grid axes -> sequential grid.
            dimension_semantics=("arbitrary", "arbitrary"),
        ),
    )(feat, idx, tgt_ck, mask_f)[0, 0]

    # Denominator: sum over only B*K mask elements; XLA fuses it for free (review item 3).
    den = jnp.sum(mask.astype(jnp.float32))
    return num / (4.0 * (den + 0.0001))


def _reference_axis_loss(output_nchw, mask, ind, target):
    """Pure-JAX reference matching the PyTorch module."""
    B, C, H, W = output_nchw.shape
    feat = jnp.transpose(output_nchw, (0, 2, 3, 1)).reshape(B, H * W, C)
    pred = feat[jnp.arange(B)[:, None], ind, :]                           # (B, K, C)
    m = mask.astype(jnp.float32)[:, :, None]                              # (B, K, 1)
    num = jnp.sum(jnp.abs(pred * m - target * m))                         # l1_loss, reduction='sum'
    return num / (4.0 * (jnp.sum(m) + 0.0001))


if __name__ == "__main__":
    key = jax.random.PRNGKey(0)
    B, C, H, W, K = 2, 8, 16, 16, 8

    k1, k2, k3, k4 = jax.random.split(key, 4)
    output = jax.random.normal(k1, (B, C, H, W), dtype=jnp.float32)
    ind = jax.random.randint(k2, (B, K), 0, H * W, dtype=jnp.int32)
    target = jax.random.normal(k3, (B, K, C), dtype=jnp.float32)
    mask = (jax.random.uniform(k4, (B, K)) > 0.3).astype(jnp.float32)

    loss = jax.block_until_ready(axis_loss(output, mask, ind, target))
    ref = jax.block_until_ready(_reference_axis_loss(output, mask, ind, target))

    assert jnp.abs(loss - ref) < 1e-4 * (1.0 + jnp.abs(ref)), (loss, ref)
    print("KERNEL_OK")
</pallas_src>

<mosaic_0001>
module attributes {stable_mosaic.version = 11 : i64} {
  func.func @_axis_loss_kernel(%arg0: i32, %arg1: i32, %arg2: memref<1x8x256xf32, #tpu.memory_space<vmem>>, %arg3: memref<1x1x8xi32, #tpu.memory_space<vmem>>, %arg4: memref<1x8x8xf32, #tpu.memory_space<vmem>>, %arg5: memref<1x1x8xf32, #tpu.memory_space<vmem>>, %arg6: memref<1x1xf32, #tpu.memory_space<smem>>, %arg7: memref<8x8xf32, #tpu.memory_space<vmem>>) attributes {dimension_semantics = [#tpu.dimension_semantics<arbitrary>, #tpu.dimension_semantics<arbitrary>], iteration_bounds = array<i64: 2, 1>, scalar_prefetch = 0 : i64, scratch_operands = 1 : i64, tpu.core_type = #tpu.core_type<tc>, window_params = [{transform_indices = @transform_0, window_bounds = array<i64: 1, 8, 256>}, {transform_indices = @transform_1, window_bounds = array<i64: 1, 1, 8>}, {transform_indices = @transform_2, window_bounds = array<i64: 1, 8, 8>}, {transform_indices = @transform_3, window_bounds = array<i64: 1, 1, 8>}, {transform_indices = @transform_4, window_bounds = array<i64: 1, 1>}]} {
    %c0_i32 = arith.constant 0 : i32
    %0 = arith.cmpi eq, %arg0, %c0_i32 : i32
    %c0_i32_0 = arith.constant 0 : i32
    %1 = arith.cmpi eq, %arg1, %c0_i32_0 : i32
    %2 = arith.andi %0, %1 : i1
    %3 = arith.extui %2 : i1 to i32
    %c0_i32_1 = arith.constant 0 : i32
    %4 = arith.cmpi ne, %3, %c0_i32_1 : i32
    scf.if %4 {
      %cst_15 = arith.constant 0.000000e+00 : f32
      %c0_16 = arith.constant 0 : index
      %c0_17 = arith.constant 0 : index
      %27 = memref.load %arg6[%c0_16, %c0_17] : memref<1x1xf32, #tpu.memory_space<smem>>
      memref.store %cst_15, %arg6[%c0_16, %c0_17] : memref<1x1xf32, #tpu.memory_space<smem>>
    } else {
    }
    %c0_i32_2 = arith.constant 0 : i32
    %5 = arith.cmpi eq, %arg1, %c0_i32_2 : i32
    %6 = arith.extui %5 : i1 to i32
    %c0_i32_3 = arith.constant 0 : i32
    %7 = arith.cmpi ne, %6, %c0_i32_3 : i32
    scf.if %7 {
      %cst_15 = arith.constant 0.000000e+00 : f32
      %27 = vector.broadcast %cst_15 : f32 to vector<8x8xf32>
      %c0_16 = arith.constant 0 : index
      %c0_17 = arith.constant 0 : index
      %28 = vector.load %arg7[%c0_16, %c0_17] : memref<8x8xf32, #tpu.memory_space<vmem>>, vector<8x8xf32>
      tpu.vector_store %arg7[%c0_16, %c0_17], %27 {strides = array<i32>} : memref<8x8xf32, #tpu.memory_space<vmem>>, vector<8x8xf32>,
    } else {
    }
    %8 = tpu.iota {dimensions = array<i32: 0>} : vector<256x8xi32>
    %c256_i32 = arith.constant 256 : i32
    %9 = arith.muli %arg1, %c256_i32 : i32
    %10 = vector.broadcast %9 : i32 to vector<256x8xi32>
    %11 = arith.addi %8, %10 : vector<256x8xi32>
    %c0 = arith.constant 0 : index
    %c0_4 = arith.constant 0 : index
    %c0_5 = arith.constant 0 : index
    %12 = vector.load %arg3[%c0, %c0_4, %c0_5] : memref<1x1x8xi32, #tpu.memory_space<vmem>>, vector<1x1x8xi32>
    %13 = vector.shape_cast %12 : vector<1x1x8xi32> to vector<1x8xi32>
    %14 = vector.broadcast %13 : vector<1x8xi32> to vector<256x8xi32>
    %15 = arith.cmpi eq, %11, %14 : vector<256x8xi32>
    %16 = arith.extui %15 : vector<256x8xi1> to vector<256x8xi32>
    %17 = arith.sitofp %16 : vector<256x8xi32> to vector<256x8xf32>
    %c0_6 = arith.constant 0 : index
    %c0_7 = arith.constant 0 : index
    %18 = vector.load %arg7[%c0_6, %c0_7] : memref<8x8xf32, #tpu.memory_space<vmem>>, vector<8x8xf32>
    %c0_8 = arith.constant 0 : index
    %c0_9 = arith.constant 0 : index
    %c0_10 = arith.constant 0 : index
    %19 = vector.load %arg2[%c0_8, %c0_9, %c0_10] : memref<1x8x256xf32, #tpu.memory_space<vmem>>, vector<1x8x256xf32>
    %20 = vector.shape_cast %19 : vector<1x8x256xf32> to vector<8x256xf32>
    %cst = arith.constant dense<0.000000e+00> : vector<8x8xf32>
    %21 = tpu.matmul %20, %17, %cst {dimension_numbers = #tpu.dot_dimension_numbers<[1], [0], [0], [1], [0, 0, 1, 1], [], []>, precision = #tpu.contract_precision<fp32>} : vector<8x256xf32>, vector<256x8xf32>, vector<8x8xf32> -> vector<8x8xf32>
    %22 = arith.addf %18, %21 : vector<8x8xf32>
    %c0_11 = arith.constant 0 : index
    %c0_12 = arith.constant 0 : index
    %23 = vector.load %arg7[%c0_11, %c0_12] : memref<8x8xf32, #tpu.memory_space<vmem>>, vector<8x8xf32>
    tpu.vector_store %arg7[%c0_11, %c0_12], %22 {strides = array<i32>} : memref<8x8xf32, #tpu.memory_space<vmem>>, vector<8x8xf32>,
    %c0_i32_13 = arith.constant 0 : i32
    %24 = arith.cmpi eq, %arg1, %c0_i32_13 : i32
    %25 = arith.extui %24 : i1 to i32
    %c0_i32_14 = arith.constant 0 : i32
    %26 = arith.cmpi ne, %25, %c0_i32_14 : i32
    scf.if %26 {
      %c0_15 = arith.constant 0 : index
      %c0_16 = arith.constant 0 : index
      %c0_17 = arith.constant 0 : index
      %27 = vector.load %arg4[%c0_15, %c0_16, %c0_17] : memref<1x8x8xf32, #tpu.memory_space<vmem>>, vector<1x8x8xf32>
      %28 = vector.shape_cast %27 : vector<1x8x8xf32> to vector<8x8xf32>
      %c0_18 = arith.constant 0 : index
      %c0_19 = arith.constant 0 : index
      %c0_20 = arith.constant 0 : index
      %29 = vector.load %arg5[%c0_18, %c0_19, %c0_20] : memref<1x1x8xf32, #tpu.memory_space<vmem>>, vector<1x1x8xf32>
      %30 = vector.shape_cast %29 : vector<1x1x8xf32> to vector<1x8xf32>
      %c0_21 = arith.constant 0 : index
      %c0_22 = arith.constant 0 : index
      %31 = memref.load %arg6[%c0_21, %c0_22] : memref<1x1xf32, #tpu.memory_space<smem>>
      %c0_23 = arith.constant 0 : index
      %c0_24 = arith.constant 0 : index
      %32 = vector.load %arg7[%c0_23, %c0_24] : memref<8x8xf32, #tpu.memory_space<vmem>>, vector<8x8xf32>
      %33 = arith.subf %32, %28 : vector<8x8xf32>
      %34 = math.absf %33 : vector<8x8xf32>
      %35 = vector.broadcast %30 : vector<1x8xf32> to vector<8x8xf32>
      %36 = arith.mulf %34, %35 : vector<8x8xf32>
      %37 = vector.shape_cast %36 : vector<8x8xf32> to vector<1x8x8xf32>
      %cst_25 = arith.constant dense<0.000000e+00> : vector<1xf32>
      %38 = vector.multi_reduction <add>, %37, %cst_25 [1, 2] : vector<1x8x8xf32> to vector<1xf32>
      %39 = vector.shape_cast %38 : vector<1xf32> to vector<1x1x1xf32>
      %40 = vector.extract %39[0, 0, 0] : f32 from vector<1x1x1xf32>
      %41 = arith.addf %31, %40 : f32
      %c0_26 = arith.constant 0 : index
      %c0_27 = arith.constant 0 : index
      %42 = memref.load %arg6[%c0_26, %c0_27] : memref<1x1xf32, #tpu.memory_space<smem>>
      memref.store %41, %arg6[%c0_26, %c0_27] : memref<1x1xf32, #tpu.memory_space<smem>>
    } else {
    }
    return
  }
  func.func @transform_0(%arg0: i32, %arg1: i32) -> (i32, i32, i32) {
    %c0_i32 = arith.constant 0 : i32
    %c0_i32_0 = arith.constant 0 : i32
    return %arg0, %c0_i32, %arg1 : i32, i32, i32
  }
  func.func @transform_1(%arg0: i32, %arg1: i32) -> (i32, i32, i32) {
    %c0_i32 = arith.constant 0 : i32
    %c0_i32_0 = arith.constant 0 : i32
    %c0_i32_1 = arith.constant 0 : i32
    return %arg0, %c0_i32, %c0_i32_0 : i32, i32, i32
  }
  func.func @transform_2(%arg0: i32, %arg1: i32) -> (i32, i32, i32) {
    %c0_i32 = arith.constant 0 : i32
    %c0_i32_0 = arith.constant 0 : i32
    %c0_i32_1 = arith.constant 0 : i32
    return %arg0, %c0_i32, %c0_i32_0 : i32, i32, i32
  }
  func.func @transform_3(%arg0: i32, %arg1: i32) -> (i32, i32, i32) {
    %c0_i32 = arith.constant 0 : i32
    %c0_i32_0 = arith.constant 0 : i32
    %c0_i32_1 = arith.constant 0 : i32
    return %arg0, %c0_i32, %c0_i32_0 : i32, i32, i32
  }
  func.func @transform_4(%arg0: i32, %arg1: i32) -> (i32, i32) {
    %c0_i32 = arith.constant 0 : i32
    %c0_i32_0 = arith.constant 0 : i32
    %c0_i32_1 = arith.constant 0 : i32
    return %c0_i32, %c0_i32_0 : i32, i32
  }
}

</mosaic_0001>

<llo_original>
// kernel: tpu_custom_call.1
$region0: #{tpu_custom_call.1}
  #allocation0 [shape = 'u32[]', space=smem, size = 0x4, offset = 0x4, fixed_abs, tag = 'smem constant byte address 0x4 - core index']
  #allocation1 [shape = 'u32[144,128]{1,0:T(1,128)}', space=vmem, size = 0x12000, scoped, tag = 'internal scratch']
  #allocation2 [shape = 'f32[8,8]{1,0:T(8,128)}', space=vmem, size = 0x1000, scoped, tag = 'scratch operand']
  %s0 = inlined_call_operand.hbm [shape: f32[2,8,256], index: 0, kind: input, shape index: {}]
  %s1 = inlined_call_operand.hbm [shape: s32[2,1,8], index: 1, kind: input, shape index: {}]
  %s2 = inlined_call_operand.hbm [shape: f32[2,8,8], index: 2, kind: input, shape index: {}]
  %s3 = inlined_call_operand.vmem [shape: f32[2,1,8], index: 3, kind: input, shape index: {}]
  %s4 = inlined_call_operand.hbm [shape: f32[1,1], index: 4, kind: output, shape index: {}]
  %s5 = sld [smem:[#allocation0]]
  $region73: #{tpu_custom_call.1} parent=0
    _
  %s7 = ssub.s32 1, %s5
  %s8 = scalar_select 0, %s7, %s5
  $region1: #{tpu_custom_call.1} parent=0
    #allocation3 [shape = 'u8[16384]{0}', space=vmem, size = 0x4000, scoped, tag = 'input window, operand 0']
    #allocation4 [shape = 's32[2]{0}', space=sflag, size = 0x8, scoped, tag = 'scoped memory for tpu_custom_call.1']
    #allocation5 [shape = 's32[2]{0}', space=sflag, size = 0x8, scoped, tag = 'scoped memory for tpu_custom_call.1']
    #allocation6 [shape = 'u8[1024]{0}', space=vmem, size = 0x400, scoped, tag = 'input window, operand 1']
    #allocation7 [shape = 's32[2]{0}', space=sflag, size = 0x8, scoped, tag = 'scoped memory for tpu_custom_call.1']
    #allocation8 [shape = 'u8[8192]{0}', space=vmem, size = 0x2000, scoped, tag = 'input window, operand 2']
    #allocation9 [shape = 'u8[512]{0}', space=smem, size = 0x200, scoped, tag = 'output window, operand 0, single buffered']
    %9 = vsyncpa [#allocation4], 0
    %s10 = scalar_lea.sflag [#allocation4], 1
    %11 = vsyncpa %s10, 0
    %12 = vsyncpa [#allocation7], 0
    %s13 = scalar_lea.sflag [#allocation7], 1
    %14 = vsyncpa %s13, 0
    %15 = vsyncpa [#allocation5], 0
    loop: start=0, step=1, limit=4
    $region2: #{tpu_custom_call.1} parent=1 // loop_pre_header
      _
    $region3: #{tpu_custom_call.1} parent=1 // loop_header
      %s17 = sphi 0, %s21
      %p18 = scmp.ge.s32.totalorder %s17, 4
      %s24 = sphi 0, %s36
      %s25 = sphi 0, %s32
      %s26 = sphi 0, %s24
      %s27 = sphi 0, %s25
      %s28 = sphi 0, %s26
      %s29 = sphi 0, %s27
      %s41 = sphi 0, %s43
      %s44 = sphi 0, %s41
      %s45 = sphi 0, %s44
      %s61 = sphi 0, %s45
      %s67 = sphi 0, %s69
      %s70 = sphi 0, %s67
      %s71 = sphi 0, %s70
      %s87 = sphi 0, %s71
      %s93 = sphi 0, %s95
      %s96 = sphi 0, %s93
      %s97 = sphi 0, %s96
      %s113 = sphi 0, %s97
      %s119 = sphi 0, %s121
      %s122 = sphi 0, %s119
      %s123 = sphi 0, %s122
      %s139 = sphi 0, %s123
      %s143 = sphi 0, %s143
      %s145 = sphi 0, %s143
      %s146 = sphi 0, %s145
      %s160 = sphi 0, %s146
    $region4: #{tpu_custom_call.1} parent=1 // loop_header_branch
      %20 = sbr.rel (%p18) target = $region8
    $region5: #{tpu_custom_call.1} parent=1 // loop_body
      %s22 = ssub.s32 %s17, 1
      %s23 = ssub.s32 %s17, 2
      %s30 = sadd.s32 1, %s25
      %p31 = scmp.ge.s32.totalorder %s30, 1
      %s32 = scalar_select %p31, 0, %s30
      %s33 = sadd.s32 1, %s24
      %s34 = scalar_select %p31, %s33, %s24
      %p35 = scmp.ge.s32.totalorder %s34, 2
      %s36 = scalar_select %p35, 0, %s34
      %s37 = ssub.s32 %s24, %s36
      %s38 = ssub.s32 %s25, %s32
      %s39 = sor.u32 %s37, %s38
      %p40 = scmp.eq.s32.totalorder %s39, 0
      %s42 = sadd.s32 %s41, 1
      %s43 = scalar_select %p40, %s41, %s42
      %p46 = pneg %p40
      %p47 = scmp.eq.s32.totalorder %s17, 1
      %p48 = por %p46, %p47
      %p49 = scmp.ne.s32.totalorder %s41, %s44
      %p50 = scmp.eq.s32.totalorder %s17, 0
      %p51 = por %p49, %p50
      %p52 = scmp.ne.s32.totalorder %s41, %s44
      %p53 = scmp.eq.s32.totalorder %s22, 1
      %p54 = por %p52, %p53
      %p55 = scmp.ne.s32.totalorder %s44, %s45
      %p56 = scmp.eq.s32.totalorder %s22, 0
      %p57 = por %p55, %p56
      %p58 = scmp.ne.s32.totalorder %s44, %s45
      %p59 = scmp.eq.s32.totalorder %s23, 1
      %p60 = por %p58, %p59
      %p62 = scmp.ne.s32.totalorder %s45, %s61
      %p63 = scmp.eq.s32.totalorder %s23, 0
      %p64 = por %p62, %p63
      %s65 = ssub.s32 %s24, %s36
      %p66 = scmp.eq.s32.totalorder %s65, 0
      %s68 = sadd.s32 %s67, 1
      %s69 = scalar_select %p66, %s67, %s68
      %p72 = pneg %p66
      %p73 = scmp.eq.s32.totalorder %s17, 1
      %p74 = por %p72, %p73
      %p75 = scmp.ne.s32.totalorder %s67, %s70
      %p76 = scmp.eq.s32.totalorder %s17, 0
      %p77 = por %p75, %p76
      %p78 = scmp.ne.s32.totalorder %s67, %s70
      %p79 = scmp.eq.s32.totalorder %s22, 1
      %p80 = por %p78, %p79
      %p81 = scmp.ne.s32.totalorder %s70, %s71
      %p82 = scmp.eq.s32.totalorder %s22, 0
      %p83 = por %p81, %p82
      %p84 = scmp.ne.s32.totalorder %s70, %s71
      %p85 = scmp.eq.s32.totalorder %s23, 1
      %p86 = por %p84, %p85
      %p88 = scmp.ne.s32.totalorder %s71, %s87
      %p89 = scmp.eq.s32.totalorder %s23, 0
      %p90 = por %p88, %p89
      %s91 = ssub.s32 %s24, %s36
      %p92 = scmp.eq.s32.totalorder %s91, 0
      %s94 = sadd.s32 %s93, 1
      %s95 = scalar_select %p92, %s93, %s94
      %p98 = pneg %p92
      %p99 = scmp.eq.s32.totalorder %s17, 1
      %p100 = por %p98, %p99
      %p101 = scmp.ne.s32.totalorder %s93, %s96
      %p102 = scmp.eq.s32.totalorder %s17, 0
      %p103 = por %p101, %p102
      %p104 = scmp.ne.s32.totalorder %s93, %s96
      %p105 = scmp.eq.s32.totalorder %s22, 1
      %p106 = por %p104, %p105
      %p107 = scmp.ne.s32.totalorder %s96, %s97
      %p108 = scmp.eq.s32.totalorder %s22, 0
      %p109 = por %p107, %p108
      %p110 = scmp.ne.s32.totalorder %s96, %s97
      %p111 = scmp.eq.s32.totalorder %s23, 1
      %p112 = por %p110, %p111
      %p114 = scmp.ne.s32.totalorder %s97, %s113
      %p115 = scmp.eq.s32.totalorder %s23, 0
      %p116 = por %p114, %p115
      %s117 = ssub.s32 %s24, %s36
      %p118 = scmp.eq.s32.totalorder %s117, 0
      %s120 = sadd.s32 %s119, 1
      %s121 = scalar_select %p118, %s119, %s120
      %p124 = pneg %p118
      %p125 = scmp.eq.s32.totalorder %s17, 1
      %p126 = por %p124, %p125
      %p127 = scmp.ne.s32.totalorder %s119, %s122
      %p128 = scmp.eq.s32.totalorder %s17, 0
      %p129 = por %p127, %p128
      %p130 = scmp.ne.s32.totalorder %s119, %s122
      %p131 = scmp.eq.s32.totalorder %s22, 1
      %p132 = por %p130, %p131
      %p133 = scmp.ne.s32.totalorder %s122, %s123
      %p134 = scmp.eq.s32.totalorder %s22, 0
      %p135 = por %p133, %p134
      %p136 = scmp.ne.s32.totalorder %s122, %s123
      %p137 = scmp.eq.s32.totalorder %s23, 1
      %p138 = por %p136, %p137
      %p140 = scmp.ne.s32.totalorder %s123, %s139
      %p141 = scmp.eq.s32.totalorder %s23, 0
      %p142 = por %p140, %p141
      %s144 = sadd.s32 %s143, 1
      %p147 = scmp.eq.s32.totalorder %s17, 1
      %p148 = scmp.ne.s32.totalorder %s143, %s145
      %p149 = scmp.eq.s32.totalorder %s17, 0
      %p150 = por %p148, %p149
      %p151 = scmp.ne.s32.totalorder %s143, %s145
      %p152 = scmp.eq.s32.totalorder %s22, 1
      %p153 = por %p151, %p152
      %p154 = scmp.ne.s32.totalorder %s145, %s146
      %p155 = scmp.eq.s32.totalorder %s22, 0
      %p156 = por %p154, %p155
      %p157 = scmp.ne.s32.totalorder %s145, %s146
      %p158 = scmp.eq.s32.totalorder %s23, 1
      %p159 = por %p157, %p158
      %p161 = scmp.ne.s32.totalorder %s146, %s160
      %p162 = scmp.eq.s32.totalorder %s23, 0
      %p163 = por %p161, %p162
      %p164 = scmp.le.s32.totalorder 1, %s17
      %p165 = scmp.lt.s32.totalorder %s17, 3
      %p166 = pnand %p164, %p165
      %p167 = pneg %p166
      // Predicated region
      $region9: #{tpu_custom_call.1} parent=5 // pred_check
        _
      $region10: #{tpu_custom_call.1} parent=5 // pred_check_branch
        %169 = sbr.rel (%p166) target = $region12
      $region11: #{tpu_custom_call.1} parent=5 // pred_region
        %s170 = ssub.s32 %s17, 1
      $region12: #{tpu_custom_call.1} parent=5 // pred_fallthru
        _
      %p171 = scmp.lt.s32.totalorder %s17, 2
      // Predicated region
      $region13: #{tpu_custom_call.1} parent=5 // pred_check
        %p172 = pneg %p171
      $region14: #{tpu_custom_call.1} parent=5 // pred_check_branch
        %174 = sbr.rel (%p172) target = $region16
      $region15: #{tpu_custom_call.1} parent=5 // pred_region
        // Predicated region
        $region17: #{tpu_custom_call.1} parent=15 // pred_check
          %p175 = pneg %p51
        $region18: #{tpu_custom_call.1} parent=15 // pred_check_branch
          %177 = sbr.rel (%p175) target = $region20
        $region19: #{tpu_custom_call.1} parent=15 // pred_region
          %s178 = sand.u32 %s41, 1
          %s179 = scalar_lea.sflag [#allocation4], %s178
          %s180 = sand.u32 %s41, 1
          %s181 = smul.addr %s180, 16
          %s182 = scalar_lea.vmem [#allocation3], %s181
          %s183 = smul.u32 2, %s25
          %s185 = ssub.s32 256, 256
          %186 = vsyncadd %s179, %s185
          %s187 = smul.addr %s24, 2
          %s188 = sadd.s32 %s183, %s187
          %s189 = smul.addr %s188, 128
          %s190 = scalar_lea.hbm %s0, %s189
          %s192 = sshll.u32 %s182, 4
          %s193 = int_to_ptr.vmem [resolvable:$true] %s192
          %195 = dma.hbm_to_vmem [thread:$0]  %s190, 256, %s193, %s179
        $region20: #{tpu_custom_call.1} parent=15 // pred_fallthru
          _
        // Predicated region
        $region21: #{tpu_custom_call.1} parent=15 // pred_check
          %p196 = pneg %p77
        $region22: #{tpu_custom_call.1} parent=15 // pred_check_branch
          %198 = sbr.rel (%p196) target = $region24
        $region23: #{tpu_custom_call.1} parent=15 // pred_region
          %s199 = sand.u32 %s17, 1
          %s200 = scalar_lea.sflag [#allocation7], %s199
          %s201 = sand.u32 %s67, 1
          %s202 = scalar_lea.vmem [#allocation6], %s201
          %s204 = ssub.s32 16, 16
          %205 = vsyncadd %s200, %s204
          %s206 = smul.addr %s24, 16
          %s207 = scalar_lea.hbm %s1, %s206
          %s209 = sshll.u32 %s202, 4
          %s210 = int_to_ptr.vmem [resolvable:$true] %s209
          %212 = dma.hbm_to_vmem [thread:$0]  %s207, 16, %s210, %s200
        $region24: #{tpu_custom_call.1} parent=15 // pred_fallthru
          _
        // Predicated region
        $region25: #{tpu_custom_call.1} parent=15 // pred_check
          %p213 = pneg %p103
        $region26: #{tpu_custom_call.1} parent=15 // pred_check_branch
          %215 = sbr.rel (%p213) target = $region28
        $region27: #{tpu_custom_call.1} parent=15 // pred_region
          %s216 = sand.u32 %s17, 1
          %s217 = scalar_lea.sflag [#allocation7], %s216
          %s218 = sand.u32 %s93, 1
          %s219 = smul.addr %s218, 8
          %s220 = scalar_lea.vmem [#allocation8], %s219
          %s222 = ssub.s32 128, 128
          %223 = vsyncadd %s217, %s222
          %s224 = smul.addr %s24, 128
          %s225 = scalar_lea.hbm %s2, %s224
          %s227 = sshll.u32 %s220, 4
          %s228 = int_to_ptr.vmem [resolvable:$true] %s227
          %230 = dma.hbm_to_vmem [thread:$0]  %s225, 128, %s228, %s217
        $region28: #{tpu_custom_call.1} parent=15 // pred_fallthru
          _
        // Predicated region
        $region29: #{tpu_custom_call.1} parent=15 // pred_check
          %p231 = pneg %p129
        $region30: #{tpu_custom_call.1} parent=15 // pred_check_branch
          %233 = sbr.rel (%p231) target = $region32
        $region31: #{tpu_custom_call.1} parent=15 // pred_region
          %p234 = scmp.lt.s32.totalorder %s24, 1
          %s235 = scalar_select %p234, %s24, 1
          %s236 = scalar_lea.vmem %s3, %s235
        $region32: #{tpu_custom_call.1} parent=15 // pred_fallthru
          _
      $region16: #{tpu_custom_call.1} parent=5 // pred_fallthru
        _
      %p237 = scmp.le.s32.totalorder 1, %s17
      %p238 = scmp.lt.s32.totalorder %s17, 3
      %p239 = pnand %p237, %p238
      %p240 = pneg %p239
      // Predicated region
      $region33: #{tpu_custom_call.1} parent=5 // pred_check
        _
      $region34: #{tpu_custom_call.1} parent=5 // pred_check_branch
        %242 = sbr.rel (%p239) target = $region36
      $region35: #{tpu_custom_call.1} parent=5 // pred_region
        %s243 = ssub.s32 %s17, 1
        %s244 = sand.u32 %s44, 1
        %s245 = scalar_lea.sflag [#allocation4], %s244
        %s246 = sand.u32 %s44, 1
        %s247 = smul.addr %s246, 16
        %s248 = scalar_lea.vmem [#allocation3], %s247
        // Predicated region
        $region37: #{tpu_custom_call.1} parent=35 // pred_check
          %p249 = pneg %p57
        $region38: #{tpu_custom_call.1} parent=35 // pred_check_branch
          %251 = sbr.rel (%p249) target = $region40
        $region39: #{tpu_custom_call.1} parent=35 // pred_region
          %252 = dma.done %s245, 256
        $region40: #{tpu_custom_call.1} parent=35 // pred_fallthru
          _
        %s253 = sand.u32 %s22, 1
        %s254 = scalar_lea.sflag [#allocation7], %s253
        %s255 = sand.u32 %s70, 1
        %s256 = scalar_lea.vmem [#allocation6], %s255
        // Predicated region
        $region41: #{tpu_custom_call.1} parent=35 // pred_check
          %p257 = pneg %p83
        $region42: #{tpu_custom_call.1} parent=35 // pred_check_branch
          %259 = sbr.rel (%p257) target = $region44
        $region43: #{tpu_custom_call.1} parent=35 // pred_region
          %260 = dma.done %s254, 16
        $region44: #{tpu_custom_call.1} parent=35 // pred_fallthru
          _
        %s261 = sand.u32 %s22, 1
        %s262 = scalar_lea.sflag [#allocation7], %s261
        %s263 = sand.u32 %s96, 1
        %s264 = smul.addr %s263, 8
        %s265 = scalar_lea.vmem [#allocation8], %s264
        // Predicated region
        $region45: #{tpu_custom_call.1} parent=35 // pred_check
          %p266 = pneg %p109
        $region46: #{tpu_custom_call.1} parent=35 // pred_check_branch
          %268 = sbr.rel (%p266) target = $region48
        $region47: #{tpu_custom_call.1} parent=35 // pred_region
          %269 = dma.done %s262, 128
        $region48: #{tpu_custom_call.1} parent=35 // pred_fallthru
          _
        %s270 = sand.u32 %s44, 1
        %s271 = scalar_lea.sflag [#allocation4], %s270
        %s272 = sand.u32 %s44, 1
        %s273 = smul.addr %s272, 16
        %s274 = scalar_lea.vmem [#allocation3], %s273
        %p275 = pneg %p57
        %p276 = pneg %p54
        %s277 = sand.u32 %s22, 1
        %s278 = scalar_lea.sflag [#allocation7], %s277
        %s279 = sand.u32 %s70, 1
        %s280 = scalar_lea.vmem [#allocation6], %s279
        %p281 = pneg %p83
        %p282 = pneg %p80
        %s283 = sand.u32 %s22, 1
        %s284 = scalar_lea.sflag [#allocation7], %s283
        %s285 = sand.u32 %s96, 1
        %s286 = smul.addr %s285, 8
        %s287 = scalar_lea.vmem [#allocation8], %s286
        %p288 = pneg %p109
        %p289 = pneg %p106
        %p290 = scmp.lt.s32.totalorder %s26, 1
        %s291 = scalar_select %p290, %s26, 1
        %s292 = scalar_lea.vmem %s3, %s291
        %p293 = pneg %p135
        %p294 = pneg %p132
        %p295 = pneg %p156
        %p296 = pneg %p153
        %s297 = smul.u32 2, %s27
        %p298 = scmp.lt.s32.totalorder %s26, 1
        %s299 = scalar_select %p298, %s26, 1
        %s300 = scalar_lea.vmem %s3, %s299
        %p301 = scmp.eq.s32.totalorder %s26, 0
        %p302 = scmp.eq.s32.totalorder %s27, 0
        %p303 = pnand %p301, %p302
        %p304 = pneg %p303
        // Predicated region
        $region49: #{tpu_custom_call.1} parent=35 // pred_check
          _
        $region50: #{tpu_custom_call.1} parent=35 // pred_check_branch
          %306 = sbr.rel (%p303) target = $region52
        $region51: #{tpu_custom_call.1} parent=35 // pred_region
          %s307 = scalar_lea.smem [#allocation9], 0
          %308 = sst [smem:[%s307]] 0.0
        $region52: #{tpu_custom_call.1} parent=35 // pred_fallthru
          _
        // Predicated region
        $region53: #{tpu_custom_call.1} parent=35 // pred_check
          %p309 = pneg %p302
        $region54: #{tpu_custom_call.1} parent=35 // pred_check_branch
          %311 = sbr.rel (%p309) target = $region56
        $region55: #{tpu_custom_call.1} parent=35 // pred_region
          %vm312 = vcmask 64512
          %313 = vst.msk [vmem:[#allocation2] sm:$0xff] %vm312, 0.0
        $region56: #{tpu_custom_call.1} parent=35 // pred_fallthru
          _
        %v314 = vlaneseq
        %v315 = vshrl.u32 %v314, 7
        %v316 = vadd.s32 %v315, 8
        %v317 = vadd.s32 %v315, 16
        %v318 = vadd.s32 %v315, 24
        %v319 = vadd.s32 %v315, 32
        %v320 = vadd.s32 %v315, 40
        %v321 = vadd.s32 %v315, 48
        %v322 = vadd.s32 %v315, 56
        %v323 = vadd.s32 %v315, 64
        %v324 = vadd.s32 %v315, 72
        %v325 = vadd.s32 %v315, 80
        %v326 = vadd.s32 %v315, 88
        %v327 = vadd.s32 %v315, 96
        %v328 = vadd.s32 %v315, 104
        %v329 = vadd.s32 %v315, 112
        %v330 = vadd.s32 %v315, 120
        %v331 = vadd.s32 %v315, 128
        %v332 = vadd.s32 %v315, 136
        %v333 = vadd.s32 %v315, 144
        %v334 = vadd.s32 %v315, 152
        %v335 = vadd.s32 %v315, 160
        %v336 = vadd.s32 %v315, 168
        %v337 = vadd.s32 %v315, 176
        %v338 = vadd.s32 %v315, 184
        %v339 = vadd.s32 %v315, 192
        %v340 = vadd.s32 %v315, 200
        %v341 = vadd.s32 %v315, 208
        %v342 = vadd.s32 %v315, 216
        %v343 = vadd.s32 %v315, 224
        %v344 = vadd.s32 %v315, 232
        %v345 = vadd.s32 %v315, 240
        %v346 = vadd.s32 %v315, 248
        %s347 = smul.u32 %s27, 256
        %v348 = vstv %s347
        %v349 = vadd.s32 %v315, %v348
        %v350 = vadd.s32 %v316, %v348
        %v351 = vadd.s32 %v317, %v348
        %v352 = vadd.s32 %v318, %v348
        %v353 = vadd.s32 %v319, %v348
        %v354 = vadd.s32 %v320, %v348
        %v355 = vadd.s32 %v321, %v348
        %v356 = vadd.s32 %v322, %v348
        %v357 = vadd.s32 %v323, %v348
        %v358 = vadd.s32 %v324, %v348
        %v359 = vadd.s32 %v325, %v348
        %v360 = vadd.s32 %v326, %v348
        %v361 = vadd.s32 %v327, %v348
        %v362 = vadd.s32 %v328, %v348
        %v363 = vadd.s32 %v329, %v348
        %v364 = vadd.s32 %v330, %v348
        %v365 = vadd.s32 %v331, %v348
        %v366 = vadd.s32 %v332, %v348
        %v367 = vadd.s32 %v333, %v348
        %v368 = vadd.s32 %v334, %v348
        %v369 = vadd.s32 %v335, %v348
        %v370 = vadd.s32 %v336, %v348
        %v371 = vadd.s32 %v337, %v348
        %v372 = vadd.s32 %v338, %v348
        %v373 = vadd.s32 %v339, %v348
        %v374 = vadd.s32 %v340, %v348
        %v375 = vadd.s32 %v341, %v348
        %v376 = vadd.s32 %v342, %v348
        %v377 = vadd.s32 %v343, %v348
        %v378 = vadd.s32 %v344, %v348
        %v379 = vadd.s32 %v345, %v348
        %v380 = vadd.s32 %v346, %v348
        %v381 = vld [vmem:[%s256] sm:$0x1]
        %v382 = vlaneseq
        %v383 = vshrl.u32 %v382, 7
        %v384 = vsub.s32 0, %v383
        %v385 = vrot.slane %v381, %v384
        %vm386 = vcmp.eq.s32.totalorder %v349, %v385
        %vm387 = vcmp.eq.s32.totalorder %v350, %v385
        %vm388 = vcmp.eq.s32.totalorder %v351, %v385
        %vm389 = vcmp.eq.s32.totalorder %v352, %v385
        %vm390 = vcmp.eq.s32.totalorder %v353, %v385
        %vm391 = vcmp.eq.s32.totalorder %v354, %v385
        %vm392 = vcmp.eq.s32.totalorder %v355, %v385
        %vm393 = vcmp.eq.s32.totalorder %v356, %v385
        %vm394 = vcmp.eq.s32.totalorder %v357, %v385
        %vm395 = vcmp.eq.s32.totalorder %v358, %v385
        %vm396 = vcmp.eq.s32.totalorder %v359, %v385
        %vm397 = vcmp.eq.s32.totalorder %v360, %v385
        %vm398 = vcmp.eq.s32.totalorder %v361, %v385
        %vm399 = vcmp.eq.s32.totalorder %v362, %v385
        %vm400 = vcmp.eq.s32.totalorder %v363, %v385
        %vm401 = vcmp.eq.s32.totalorder %v364, %v385
        %vm402 = vcmp.eq.s32.totalorder %v365, %v385
        %vm403 = vcmp.eq.s32.totalorder %v366, %v385
        %vm404 = vcmp.eq.s32.totalorder %v367, %v385
        %vm405 = vcmp.eq.s32.totalorder %v368, %v385
        %vm406 = vcmp.eq.s32.totalorder %v369, %v385
        %vm407 = vcmp.eq.s32.totalorder %v370, %v385
        %vm408 = vcmp.eq.s32.totalorder %v371, %v385
        %vm409 = vcmp.eq.s32.totalorder %v372, %v385
        %vm410 = vcmp.eq.s32.totalorder %v373, %v385
        %vm411 = vcmp.eq.s32.totalorder %v374, %v385
        %vm412 = vcmp.eq.s32.totalorder %v375, %v385
        %vm413 = vcmp.eq.s32.totalorder %v376, %v385
        %vm414 = vcmp.eq.s32.totalorder %v377, %v385
        %vm415 = vcmp.eq.s32.totalorder %v378, %v385
        %vm416 = vcmp.eq.s32.totalorder %v379, %v385
        %vm417 = vcmp.eq.s32.totalorder %v380, %v385
        %v418 = vsel %vm386, 1, 0
        %v419 = vsel %vm387, 1, 0
        %v420 = vsel %vm388, 1, 0
        %v421 = vsel %vm389, 1, 0
        %v422 = vsel %vm390, 1, 0
        %v423 = vsel %vm391, 1, 0
        %v424 = vsel %vm392, 1, 0
        %v425 = vsel %vm393, 1, 0
        %v426 = vsel %vm394, 1, 0
        %v427 = vsel %vm395, 1, 0
        %v428 = vsel %vm396, 1, 0
        %v429 = vsel %vm397, 1, 0
        %v430 = vsel %vm398, 1, 0
        %v431 = vsel %vm399, 1, 0
        %v432 = vsel %vm400, 1, 0
        %v433 = vsel %vm401, 1, 0
        %v434 = vsel %vm402, 1, 0
        %v435 = vsel %vm403, 1, 0
        %v436 = vsel %vm404, 1, 0
        %v437 = vsel %vm405, 1, 0
        %v438 = vsel %vm406, 1, 0
        %v439 = vsel %vm407, 1, 0
        %v440 = vsel %vm408, 1, 0
        %v441 = vsel %vm409, 1, 0
        %v442 = vsel %vm410, 1, 0
        %v443 = vsel %vm411, 1, 0
        %v444 = vsel %vm412, 1, 0
        %v445 = vsel %vm413, 1, 0
        %v446 = vsel %vm414, 1, 0
        %v447 = vsel %vm415, 1, 0
        %v448 = vsel %vm416, 1, 0
        %v449 = vsel %vm417, 1, 0
        %v450 = vcvt.s32.f32 %v418
        %v451 = vcvt.s32.f32 %v419
        %v452 = vcvt.s32.f32 %v420
        %v453 = vcvt.s32.f32 %v421
        %v454 = vcvt.s32.f32 %v422
        %v455 = vcvt.s32.f32 %v423
        %v456 = vcvt.s32.f32 %v424
        %v457 = vcvt.s32.f32 %v425
        %v458 = vcvt.s32.f32 %v426
        %v459 = vcvt.s32.f32 %v427
        %v460 = vcvt.s32.f32 %v428
        %v461 = vcvt.s32.f32 %v429
        %v462 = vcvt.s32.f32 %v430
        %v463 = vcvt.s32.f32 %v431
        %v464 = vcvt.s32.f32 %v432
        %v465 = vcvt.s32.f32 %v433
        %v466 = vcvt.s32.f32 %v434
        %v467 = vcvt.s32.f32 %v435
        %v468 = vcvt.s32.f32 %v436
        %v469 = vcvt.s32.f32 %v437
        %v470 = vcvt.s32.f32 %v438
        %v471 = vcvt.s32.f32 %v439
        %v472 = vcvt.s32.f32 %v440
        %v473 = vcvt.s32.f32 %v441
        %v474 = vcvt.s32.f32 %v442
        %v475 = vcvt.s32.f32 %v443
        %v476 = vcvt.s32.f32 %v444
        %v477 = vcvt.s32.f32 %v445
        %v478 = vcvt.s32.f32 %v446
        %v479 = vcvt.s32.f32 %v447
        %v480 = vcvt.s32.f32 %v448
        %v481 = vcvt.s32.f32 %v449
        %v482 = vld [vmem:[#allocation2] sm:$0xff]
        %v483 = vld [vmem:[%s248] sm:$0xff]
        %v484 = vld [vmem:[%s248 + $0x8] sm:$0xff]
        %485 = vmatprep.subr.mxu0 0.0
        %v486 = vand.u32 %v465, 4294901760
        %487 = vmatpush1.msra.mxu0 %v486
        %488 = vmatprep.subr.mxu0 0.0
        %v489 = vand.u32 %v464, 4294901760
        %490 = vmatpush1.msra.mxu0 %v489
        %491 = vmatprep.subr.mxu0 0.0
        %v492 = vand.u32 %v463, 4294901760
        %493 = vmatpush1.msra.mxu0 %v492
        %494 = vmatprep.subr.mxu0 0.0
        %v495 = vand.u32 %v462, 4294901760
        %496 = vmatpush1.msra.mxu0 %v495
        %497 = vmatprep.subr.mxu0 0.0
        %v498 = vand.u32 %v461, 4294901760
        %499 = vmatpush1.msra.mxu0 %v498
        %500 = vmatprep.subr.mxu0 0.0
        %v501 = vand.u32 %v460, 4294901760
        %502 = vmatpush1.msra.mxu0 %v501
        %503 = vmatprep.subr.mxu0 0.0
        %v504 = vand.u32 %v459, 4294901760
        %505 = vmatpush1.msra.mxu0 %v504
        %506 = vmatprep.subr.mxu0 0.0
        %v507 = vand.u32 %v458, 4294901760
        %508 = vmatpush1.msra.mxu0 %v507
        %509 = vmatprep.subr.mxu0 0.0
        %v510 = vand.u32 %v457, 4294901760
        %511 = vmatpush1.msra.mxu0 %v510
        %512 = vmatprep.subr.mxu0 0.0
        %v513 = vand.u32 %v456, 4294901760
        %514 = vmatpush1.msra.mxu0 %v513
        %515 = vmatprep.subr.mxu0 0.0
        %v516 = vand.u32 %v455, 4294901760
        %517 = vmatpush1.msra.mxu0 %v516
        %518 = vmatprep.subr.mxu0 0.0
        %v519 = vand.u32 %v454, 4294901760
        %520 = vmatpush1.msra.mxu0 %v519
        %521 = vmatprep.subr.mxu0 0.0
        %v522 = vand.u32 %v453, 4294901760
        %523 = vmatpush1.msra.mxu0 %v522
        %524 = vmatprep.subr.mxu0 0.0
        %v525 = vand.u32 %v452, 4294901760
        %526 = vmatpush1.msra.mxu0 %v525
        %527 = vmatprep.subr.mxu0 0.0
        %v528 = vand.u32 %v451, 4294901760
        %529 = vmatpush1.msra.mxu0 %v528
        %530 = vmatprep.subr.mxu0 0.0
        %v531 = vand.u32 %v450, 4294901760
        %532 = vmatpush1.msra.mxu0 %v531
        %533 = vmatprep.subr.mxu0 0.0
        %v534 = vand.u32 %v481, 4294901760
        %535 = vmatpush2.msra.mxu0 %v534
        %536 = vmatprep.subr.mxu0 0.0
        %v537 = vand.u32 %v480, 4294901760
        %538 = vmatpush2.msra.mxu0 %v537
        %539 = vmatprep.subr.mxu0 0.0
        %v540 = vand.u32 %v479, 4294901760
        %541 = vmatpush2.msra.mxu0 %v540
        %542 = vmatprep.subr.mxu0 0.0
        %v543 = vand.u32 %v478, 4294901760
        %544 = vmatpush2.msra.mxu0 %v543
        %545 = vmatprep.subr.mxu0 0.0
        %v546 = vand.u32 %v477, 4294901760
        %547 = vmatpush2.msra.mxu0 %v546
        %548 = vmatprep.subr.mxu0 0.0
        %v549 = vand.u32 %v476, 4294901760
        %550 = vmatpush2.msra.mxu0 %v549
        %551 = vmatprep.subr.mxu0 0.0
        %v552 = vand.u32 %v475, 4294901760
        %553 = vmatpush2.msra.mxu0 %v552
        %554 = vmatprep.subr.mxu0 0.0
        %v555 = vand.u32 %v474, 4294901760
        %556 = vmatpush2.msra.mxu0 %v555
        %557 = vmatprep.subr.mxu0 0.0
        %v558 = vand.u32 %v473, 4294901760
        %559 = vmatpush2.msra.mxu0 %v558
        %560 = vmatprep.subr.mxu0 0.0
        %v561 = vand.u32 %v472, 4294901760
        %562 = vmatpush2.msra.mxu0 %v561
        %563 = vmatprep.subr.mxu0 0.0
        %v564 = vand.u32 %v471, 4294901760
        %565 = vmatpush2.msra.mxu0 %v564
        %566 = vmatprep.subr.mxu0 0.0
        %v567 = vand.u32 %v470, 4294901760
        %568 = vmatpush2.msra.mxu0 %v567
        %569 = vmatprep.subr.mxu0 0.0
        %v570 = vand.u32 %v469, 4294901760
        %571 = vmatpush2.msra.mxu0 %v570
        %572 = vmatprep.subr.mxu0 0.0
        %v573 = vand.u32 %v468, 4294901760
        %574 = vmatpush2.msra.mxu0 %v573
        %575 = vmatprep.subr.mxu0 0.0
        %v576 = vand.u32 %v467, 4294901760
        %577 = vmatpush2.msra.mxu0 %v576
        %578 = vmatprep.subr.mxu0 0.0
        %v579 = vand.u32 %v466, 4294901760
        %580 = vmatpush2.msra.mxu0 %v579
        %v581 = vand.u32 %v484, 4294901760
        %v582 = vsub.f32 %v484, %v581
        %v583 = vand.u32 %v582, 4294901760
        %v584 = vsub.f32 %v582, %v583
        %v585 = vand.u32 %v584, 4294901760
        %586 = vmatprep.mubr.f32.mxu0 %v585
        %v587 = vand.u32 %v483, 4294901760
        %v588 = vsub.f32 %v483, %v587
        %v589 = vand.u32 %v588, 4294901760
        %v590 = vsub.f32 %v588, %v589
        %v591 = vand.u32 %v590, 4294901760
        %592 = vmatmul.mubr.f32.gmra.mxu0 %v591
        %v593 = vpop.f32.mrf.mxu0
        %v594 = vadd.f32 0.0, %v593
        %v595 = vpop.f32.mrf.mxu0
        %596 = vdwg.mxu0
        %597 = vmatprep.subr.mxu0 0.0
        %v598 = vand.u32 %v465, 4294901760
        %v599 = vsub.f32 %v465, %v598
        %v600 = vand.u32 %v599, 4294901760
        %v601 = vsub.f32 %v599, %v600
        %v602 = vand.u32 %v601, 4294901760
        %603 = vmatpush1.msra.mxu0 %v602
        %604 = vmatprep.subr.mxu0 0.0
        %v605 = vand.u32 %v464, 4294901760
        %v606 = vsub.f32 %v464, %v605
        %v607 = vand.u32 %v606, 4294901760
        %v608 = vsub.f32 %v606, %v607
        %v609 = vand.u32 %v608, 4294901760
        %610 = vmatpush1.msra.mxu0 %v609
        %611 = vmatprep.subr.mxu0 0.0
        %v612 = vand.u32 %v463, 4294901760
        %v613 = vsub.f32 %v463, %v612
        %v614 = vand.u32 %v613, 4294901760
        %v615 = vsub.f32 %v613, %v614
        %v616 = vand.u32 %v615, 4294901760
        %617 = vmatpush1.msra.mxu0 %v616
        %618 = vmatprep.subr.mxu0 0.0
        %v619 = vand.u32 %v462, 4294901760
        %v620 = vsub.f32 %v462, %v619
        %v621 = vand.u32 %v620, 4294901760
        %v622 = vsub.f32 %v620, %v621
        %v623 = vand.u32 %v622, 4294901760
        %624 = vmatpush1.msra.mxu0 %v623
        %625 = vmatprep.subr.mxu0 0.0
        %v626 = vand.u32 %v461, 4294901760
        %v627 = vsub.f32 %v461, %v626
        %v628 = vand.u32 %v627, 4294901760
        %v629 = vsub.f32 %v627, %v628
        %v630 = vand.u32 %v629, 4294901760
        %631 = vmatpush1.msra.mxu0 %v630
        %632 = vmatprep.subr.mxu0 0.0
        %v633 = vand.u32 %v460, 4294901760
        %v634 = vsub.f32 %v460, %v633
        %v635 = vand.u32 %v634, 4294901760
        %v636 = vsub.f32 %v634, %v635
        %v637 = vand.u32 %v636, 4294901760
        %638 = vmatpush1.msra.mxu0 %v637
        %639 = vmatprep.subr.mxu0 0.0
        %v640 = vand.u32 %v459, 4294901760
        %v641 = vsub.f32 %v459, %v640
        %v642 = vand.u32 %v641, 4294901760
        %v643 = vsub.f32 %v641, %v642
        %v644 = vand.u32 %v643, 4294901760
        %645 = vmatpush1.msra.mxu0 %v644
        %646 = vmatprep.subr.mxu0 0.0
        %v647 = vand.u32 %v458, 4294901760
        %v648 = vsub.f32 %v458, %v647
        %v649 = vand.u32 %v648, 4294901760
        %v650 = vsub.f32 %v648, %v649
        %v651 = vand.u32 %v650, 4294901760
        %652 = vmatpush1.msra.mxu0 %v651
        %653 = vmatprep.subr.mxu0 0.0
        %v654 = vand.u32 %v457, 4294901760
        %v655 = vsub.f32 %v457, %v654
        %v656 = vand.u32 %v655, 4294901760
        %v657 = vsub.f32 %v655, %v656
        %v658 = vand.u32 %v657, 4294901760
        %659 = vmatpush1.msra.mxu0 %v658
        %660 = vmatprep.subr.mxu0 0.0
        %v661 = vand.u32 %v456, 4294901760
        %v662 = vsub.f32 %v456, %v661
        %v663 = vand.u32 %v662, 4294901760
        %v664 = vsub.f32 %v662, %v663
        %v665 = vand.u32 %v664, 4294901760
        %666 = vmatpush1.msra.mxu0 %v665
        %667 = vmatprep.subr.mxu0 0.0
        %v668 = vand.u32 %v455, 4294901760
        %v669 = vsub.f32 %v455, %v668
        %v670 = vand.u32 %v669, 4294901760
        %v671 = vsub.f32 %v669, %v670
        %v672 = vand.u32 %v671, 4294901760
        %673 = vmatpush1.msra.mxu0 %v672
        %674 = vmatprep.subr.mxu0 0.0
        %v675 = vand.u32 %v454, 4294901760
        %v676 = vsub.f32 %v454, %v675
        %v677 = vand.u32 %v676, 4294901760
        %v678 = vsub.f32 %v676, %v677
        %v679 = vand.u32 %v678, 4294901760
        %680 = vmatpush1.msra.mxu0 %v679
        %681 = vmatprep.subr.mxu0 0.0
        %v682 = vand.u32 %v453, 4294901760
        %v683 = vsub.f32 %v453, %v682
        %v684 = vand.u32 %v683, 4294901760
        %v685 = vsub.f32 %v683, %v684
        %v686 = vand.u32 %v685, 4294901760
        %687 = vmatpush1.msra.mxu0 %v686
        %688 = vmatprep.subr.mxu0 0.0
        %v689 = vand.u32 %v452, 4294901760
        %v690 = vsub.f32 %v452, %v689
        %v691 = vand.u32 %v690, 4294901760
        %v692 = vsub.f32 %v690, %v691
        %v693 = vand.u32 %v692, 4294901760
        %694 = vmatpush1.msra.mxu0 %v693
        %695 = vmatprep.subr.mxu0 0.0
        %v696 = vand.u32 %v451, 4294901760
        %v697 = vsub.f32 %v451, %v696
        %v698 = vand.u32 %v697, 4294901760
        %v699 = vsub.f32 %v697, %v698
        %v700 = vand.u32 %v699, 4294901760
        %701 = vmatpush1.msra.mxu0 %v700
        %702 = vmatprep.subr.mxu0 0.0
        %v703 = vand.u32 %v450, 4294901760
        %v704 = vsub.f32 %v450, %v703
        %v705 = vand.u32 %v704, 4294901760
        %v706 = vsub.f32 %v704, %v705
        %v707 = vand.u32 %v706, 4294901760
        %708 = vmatpush1.msra.mxu0 %v707
        %709 = vmatprep.subr.mxu0 0.0
        %v710 = vand.u32 %v481, 4294901760
        %v711 = vsub.f32 %v481, %v710
        %v712 = vand.u32 %v711, 4294901760
        %v713 = vsub.f32 %v711, %v712
        %v714 = vand.u32 %v713, 4294901760
        %715 = vmatpush2.msra.mxu0 %v714
        %716 = vmatprep.subr.mxu0 0.0
        %v717 = vand.u32 %v480, 4294901760
        %v718 = vsub.f32 %v480, %v717
        %v719 = vand.u32 %v718, 4294901760
        %v720 = vsub.f32 %v718, %v719
        %v721 = vand.u32 %v720, 4294901760
        %722 = vmatpush2.msra.mxu0 %v721
        %723 = vmatprep.subr.mxu0 0.0
        %v724 = vand.u32 %v479, 4294901760
        %v725 = vsub.f32 %v479, %v724
        %v726 = vand.u32 %v725, 4294901760
        %v727 = vsub.f32 %v725, %v726
        %v728 = vand.u32 %v727, 4294901760
        %729 = vmatpush2.msra.mxu0 %v728
        %730 = vmatprep.subr.mxu0 0.0
        %v731 = vand.u32 %v478, 4294901760
        %v732 = vsub.f32 %v478, %v731
        %v733 = vand.u32 %v732, 4294901760
        %v734 = vsub.f32 %v732, %v733
        %v735 = vand.u32 %v734, 4294901760
        %736 = vmatpush2.msra.mxu0 %v735
        %737 = vmatprep.subr.mxu0 0.0
        %v738 = vand.u32 %v477, 4294901760
        %v739 = vsub.f32 %v477, %v738
        %v740 = vand.u32 %v739, 4294901760
        %v741 = vsub.f32 %v739, %v740
        %v742 = vand.u32 %v741, 4294901760
        %743 = vmatpush2.msra.mxu0 %v742
        %744 = vmatprep.subr.mxu0 0.0
        %v745 = vand.u32 %v476, 4294901760
        %v746 = vsub.f32 %v476, %v745
        %v747 = vand.u32 %v746, 4294901760
        %v748 = vsub.f32 %v746, %v747
        %v749 = vand.u32 %v748, 4294901760
        %750 = vmatpush2.msra.mxu0 %v749
        %751 = vmatprep.subr.mxu0 0.0
        %v752 = vand.u32 %v475, 4294901760
        %v753 = vsub.f32 %v475, %v752
        %v754 = vand.u32 %v753, 4294901760
        %v755 = vsub.f32 %v753, %v754
        %v756 = vand.u32 %v755, 4294901760
        %757 = vmatpush2.msra.mxu0 %v756
        %758 = vmatprep.subr.mxu0 0.0
        %v759 = vand.u32 %v474, 4294901760
        %v760 = vsub.f32 %v474, %v759
        %v761 = vand.u32 %v760, 4294901760
        %v762 = vsub.f32 %v760, %v761
        %v763 = vand.u32 %v762, 4294901760
        %764 = vmatpush2.msra.mxu0 %v763
        %765 = vmatprep.subr.mxu0 0.0
        %v766 = vand.u32 %v473, 4294901760
        %v767 = vsub.f32 %v473, %v766
        %v768 = vand.u32 %v767, 4294901760
        %v769 = vsub.f32 %v767, %v768
        %v770 = vand.u32 %v769, 4294901760
        %771 = vmatpush2.msra.mxu0 %v770
        %772 = vmatprep.subr.mxu0 0.0
        %v773 = vand.u32 %v472, 4294901760
        %v774 = vsub.f32 %v472, %v773
        %v775 = vand.u32 %v774, 4294901760
        %v776 = vsub.f32 %v774, %v775
        %v777 = vand.u32 %v776, 4294901760
        %778 = vmatpush2.msra.mxu0 %v777
        %779 = vmatprep.subr.mxu0 0.0
        %v780 = vand.u32 %v471, 4294901760
        %v781 = vsub.f32 %v471, %v780
        %v782 = vand.u32 %v781, 4294901760
        %v783 = vsub.f32 %v781, %v782
        %v784 = vand.u32 %v783, 4294901760
        %785 = vmatpush2.msra.mxu0 %v784
        %786 = vmatprep.subr.mxu0 0.0
        %v787 = vand.u32 %v470, 4294901760
        %v788 = vsub.f32 %v470, %v787
        %v789 = vand.u32 %v788, 4294901760
        %v790 = vsub.f32 %v788, %v789
        %v791 = vand.u32 %v790, 4294901760
        %792 = vmatpush2.msra.mxu0 %v791
        %793 = vmatprep.subr.mxu0 0.0
        %v794 = vand.u32 %v469, 4294901760
        %v795 = vsub.f32 %v469, %v794
        %v796 = vand.u32 %v795, 4294901760
        %v797 = vsub.f32 %v795, %v796
        %v798 = vand.u32 %v797, 4294901760
        %799 = vmatpush2.msra.mxu0 %v798
        %800 = vmatprep.subr.mxu0 0.0
        %v801 = vand.u32 %v468, 4294901760
        %v802 = vsub.f32 %v468, %v801
        %v803 = vand.u32 %v802, 4294901760
        %v804 = vsub.f32 %v802, %v803
        %v805 = vand.u32 %v804, 4294901760
        %806 = vmatpush2.msra.mxu0 %v805
        %807 = vmatprep.subr.mxu0 0.0
        %v808 = vand.u32 %v467, 4294901760
        %v809 = vsub.f32 %v467, %v808
        %v810 = vand.u32 %v809, 4294901760
        %v811 = vsub.f32 %v809, %v810
        %v812 = vand.u32 %v811, 4294901760
        %813 = vmatpush2.msra.mxu0 %v812
        %814 = vmatprep.subr.mxu0 0.0
        %v815 = vand.u32 %v466, 4294901760
        %v816 = vsub.f32 %v466, %v815
        %v817 = vand.u32 %v816, 4294901760
        %v818 = vsub.f32 %v816, %v817
        %v819 = vand.u32 %v818, 4294901760
        %820 = vmatpush2.msra.mxu0 %v819
        %v821 = vand.u32 %v484, 4294901760
        %822 = vmatprep.mubr.f32.mxu0 %v821
        %v823 = vand.u32 %v483, 4294901760
        %824 = vmatmul.mubr.f32.gmra.mxu0 %v823
        %v825 = vpop.f32.mrf.mxu0
        %v826 = vadd.f32 %v594, %v825
        %v827 = vpop.f32.mrf.mxu0
        %828 = vdwg.mxu0
        %829 = vmatprep.subr.mxu0 0.0
        %v830 = vand.u32 %v465, 4294901760
        %v831 = vsub.f32 %v465, %v830
        %832 = vmatpush1.msra.mxu0 %v831
        %833 = vmatprep.subr.mxu0 0.0
        %v834 = vand.u32 %v464, 4294901760
        %v835 = vsub.f32 %v464, %v834
        %836 = vmatpush1.msra.mxu0 %v835
        %837 = vmatprep.subr.mxu0 0.0
        %v838 = vand.u32 %v463, 4294901760
        %v839 = vsub.f32 %v463, %v838
        %840 = vmatpush1.msra.mxu0 %v839
        %841 = vmatprep.subr.mxu0 0.0
        %v842 = vand.u32 %v462, 4294901760
        %v843 = vsub.f32 %v462, %v842
        %844 = vmatpush1.msra.mxu0 %v843
        %845 = vmatprep.subr.mxu0 0.0
        %v846 = vand.u32 %v461, 4294901760
        %v847 = vsub.f32 %v461, %v846
        %848 = vmatpush1.msra.mxu0 %v847
        %849 = vmatprep.subr.mxu0 0.0
        %v850 = vand.u32 %v460, 4294901760
        %v851 = vsub.f32 %v460, %v850
        %852 = vmatpush1.msra.mxu0 %v851
        %853 = vmatprep.subr.mxu0 0.0
        %v854 = vand.u32 %v459, 4294901760
        %v855 = vsub.f32 %v459, %v854
        %856 = vmatpush1.msra.mxu0 %v855
        %857 = vmatprep.subr.mxu0 0.0
        %v858 = vand.u32 %v458, 4294901760
        %v859 = vsub.f32 %v458, %v858
        %860 = vmatpush1.msra.mxu0 %v859
        %861 = vmatprep.subr.mxu0 0.0
        %v862 = vand.u32 %v457, 4294901760
        %v863 = vsub.f32 %v457, %v862
        %864 = vmatpush1.msra.mxu0 %v863
        %865 = vmatprep.subr.mxu0 0.0
        %v866 = vand.u32 %v456, 4294901760
        %v867 = vsub.f32 %v456, %v866
        %868 = vmatpush1.msra.mxu0 %v867
        %869 = vmatprep.subr.mxu0 0.0
        %v870 = vand.u32 %v455, 4294901760
        %v871 = vsub.f32 %v455, %v870
        %872 = vmatpush1.msra.mxu0 %v871
        %873 = vmatprep.subr.mxu0 0.0
        %v874 = vand.u32 %v454, 4294901760
        %v875 = vsub.f32 %v454, %v874
        %876 = vmatpush1.msra.mxu0 %v875
        %877 = vmatprep.subr.mxu0 0.0
        %v878 = vand.u32 %v453, 4294901760
        %v879 = vsub.f32 %v453, %v878
        %880 = vmatpush1.msra.mxu0 %v879
        %881 = vmatprep.subr.mxu0 0.0
        %v882 = vand.u32 %v452, 4294901760
        %v883 = vsub.f32 %v452, %v882
        %884 = vmatpush1.msra.mxu0 %v883
        %885 = vmatprep.subr.mxu0 0.0
        %v886 = vand.u32 %v451, 4294901760
        %v887 = vsub.f32 %v451, %v886
        %888 = vmatpush1.msra.mxu0 %v887
        %889 = vmatprep.subr.mxu0 0.0
        %v890 = vand.u32 %v450, 4294901760
        %v891 = vsub.f32 %v450, %v890
        %892 = vmatpush1.msra.mxu0 %v891
        %893 = vmatprep.subr.mxu0 0.0
        %v894 = vand.u32 %v481, 4294901760
        %v895 = vsub.f32 %v481, %v894
        %896 = vmatpush2.msra.mxu0 %v895
        %897 = vmatprep.subr.mxu0 0.0
        %v898 = vand.u32 %v480, 4294901760
        %v899 = vsub.f32 %v480, %v898
        %900 = vmatpush2.msra.mxu0 %v899
        %901 = vmatprep.subr.mxu0 0.0
        %v902 = vand.u32 %v479, 4294901760
        %v903 = vsub.f32 %v479, %v902
        %904 = vmatpush2.msra.mxu0 %v903
        %905 = vmatprep.subr.mxu0 0.0
        %v906 = vand.u32 %v478, 4294901760
        %v907 = vsub.f32 %v478, %v906
        %908 = vmatpush2.msra.mxu0 %v907
        %909 = vmatprep.subr.mxu0 0.0
        %v910 = vand.u32 %v477, 4294901760
        %v911 = vsub.f32 %v477, %v910
        %912 = vmatpush2.msra.mxu0 %v911
        %913 = vmatprep.subr.mxu0 0.0
        %v914 = vand.u32 %v476, 4294901760
        %v915 = vsub.f32 %v476, %v914
        %916 = vmatpush2.msra.mxu0 %v915
        %917 = vmatprep.subr.mxu0 0.0
        %v918 = vand.u32 %v475, 4294901760
        %v919 = vsub.f32 %v475, %v918
        %920 = vmatpush2.msra.mxu0 %v919
        %921 = vmatprep.subr.mxu0 0.0
        %v922 = vand.u32 %v474, 4294901760
        %v923 = vsub.f32 %v474, %v922
        %924 = vmatpush2.msra.mxu0 %v923
        %925 = vmatprep.subr.mxu0 0.0
        %v926 = vand.u32 %v473, 4294901760
        %v927 = vsub.f32 %v473, %v926
        %928 = vmatpush2.msra.mxu0 %v927
        %929 = vmatprep.subr.mxu0 0.0
        %v930 = vand.u32 %v472, 4294901760
        %v931 = vsub.f32 %v472, %v930
        %932 = vmatpush2.msra.mxu0 %v931
        %933 = vmatprep.subr.mxu0 0.0
        %v934 = vand.u32 %v471, 4294901760
        %v935 = vsub.f32 %v471, %v934
        %936 = vmatpush2.msra.mxu0 %v935
        %937 = vmatprep.subr.mxu0 0.0
        %v938 = vand.u32 %v470, 4294901760
        %v939 = vsub.f32 %v470, %v938
        %940 = vmatpush2.msra.mxu0 %v939
        %941 = vmatprep.subr.mxu0 0.0
        %v942 = vand.u32 %v469, 4294901760
        %v943 = vsub.f32 %v469, %v942
        %944 = vmatpush2.msra.mxu0 %v943
        %945 = vmatprep.subr.mxu0 0.0
        %v946 = vand.u32 %v468, 4294901760
        %v947 = vsub.f32 %v468, %v946
        %948 = vmatpush2.msra.mxu0 %v947
        %949 = vmatprep.subr.mxu0 0.0
        %v950 = vand.u32 %v467, 4294901760
        %v951 = vsub.f32 %v467, %v950
        %952 = vmatpush2.msra.mxu0 %v951
        %953 = vmatprep.subr.mxu0 0.0
        %v954 = vand.u32 %v466, 4294901760
        %v955 = vsub.f32 %v466, %v954
        %956 = vmatpush2.msra.mxu0 %v955
        %v957 = vand.u32 %v484, 4294901760
        %v958 = vsub.f32 %v484, %v957
        %959 = vmatprep.mubr.f32.mxu0 %v958
        %v960 = vand.u32 %v483, 4294901760
        %v961 = vsub.f32 %v483, %v960
        %962 = vmatmul.mubr.f32.gmra.mxu0 %v961
        %v963 = vpop.f32.mrf.mxu0
        %v964 = vadd.f32 %v826, %v963
        %v965 = vpop.f32.mrf.mxu0
        %966 = vdwg.mxu0
        %967 = vmatprep.subr.mxu0 0.0
        %v968 = vand.u32 %v465, 4294901760
        %969 = vmatpush1.msra.mxu0 %v968
        %970 = vmatprep.subr.mxu0 0.0
        %v971 = vand.u32 %v464, 4294901760
        %972 = vmatpush1.msra.mxu0 %v971
        %973 = vmatprep.subr.mxu0 0.0
        %v974 = vand.u32 %v463, 4294901760
        %975 = vmatpush1.msra.mxu0 %v974
        %976 = vmatprep.subr.mxu0 0.0
        %v977 = vand.u32 %v462, 4294901760
        %978 = vmatpush1.msra.mxu0 %v977
        %979 = vmatprep.subr.mxu0 0.0
        %v980 = vand.u32 %v461, 4294901760
        %981 = vmatpush1.msra.mxu0 %v980
        %982 = vmatprep.subr.mxu0 0.0
        %v983 = vand.u32 %v460, 4294901760
        %984 = vmatpush1.msra.mxu0 %v983
        %985 = vmatprep.subr.mxu0 0.0
        %v986 = vand.u32 %v459, 4294901760
        %987 = vmatpush1.msra.mxu0 %v986
        %988 = vmatprep.subr.mxu0 0.0
        %v989 = vand.u32 %v458, 4294901760
        %990 = vmatpush1.msra.mxu0 %v989
        %991 = vmatprep.subr.mxu0 0.0
        %v992 = vand.u32 %v457, 4294901760
        %993 = vmatpush1.msra.mxu0 %v992
        %994 = vmatprep.subr.mxu0 0.0
        %v995 = vand.u32 %v456, 4294901760
        %996 = vmatpush1.msra.mxu0 %v995
        %997 = vmatprep.subr.mxu0 0.0
        %v998 = vand.u32 %v455, 4294901760
        %999 = vmatpush1.msra.mxu0 %v998
        %1000 = vmatprep.subr.mxu0 0.0
        %v1001 = vand.u32 %v454, 4294901760
        %1002 = vmatpush1.msra.mxu0 %v1001
        %1003 = vmatprep.subr.mxu0 0.0
        %v1004 = vand.u32 %v453, 4294901760
        %1005 = vmatpush1.msra.mxu0 %v1004
        %1006 = vmatprep.subr.mxu0 0.0
        %v1007 = vand.u32 %v452, 4294901760
        %1008 = vmatpush1.msra.mxu0 %v1007
        %1009 = vmatprep.subr.mxu0 0.0
        %v1010 = vand.u32 %v451, 4294901760
        %1011 = vmatpush1.msra.mxu0 %v1010
        %1012 = vmatprep.subr.mxu0 0.0
        %v1013 = vand.u32 %v450, 4294901760
        %1014 = vmatpush1.msra.mxu0 %v1013
        %1015 = vmatprep.subr.mxu0 0.0
        %v1016 = vand.u32 %v481, 4294901760
        %1017 = vmatpush2.msra.mxu0 %v1016
        %1018 = vmatprep.subr.mxu0 0.0
        %v1019 = vand.u32 %v480, 4294901760
        %1020 = vmatpush2.msra.mxu0 %v1019
        %1021 = vmatprep.subr.mxu0 0.0
        %v1022 = vand.u32 %v479, 4294901760
        %1023 = vmatpush2.msra.mxu0 %v1022
        %1024 = vmatprep.subr.mxu0 0.0
        %v1025 = vand.u32 %v478, 4294901760
        %1026 = vmatpush2.msra.mxu0 %v1025
        %1027 = vmatprep.subr.mxu0 0.0
        %v1028 = vand.u32 %v477, 4294901760
        %1029 = vmatpush2.msra.mxu0 %v1028
        %1030 = vmatprep.subr.mxu0 0.0
        %v1031 = vand.u32 %v476, 4294901760
        %1032 = vmatpush2.msra.mxu0 %v1031
        %1033 = vmatprep.subr.mxu0 0.0
        %v1034 = vand.u32 %v475, 4294901760
        %1035 = vmatpush2.msra.mxu0 %v1034
        %1036 = vmatprep.subr.mxu0 0.0
        %v1037 = vand.u32 %v474, 4294901760
        %1038 = vmatpush2.msra.mxu0 %v1037
        %1039 = vmatprep.subr.mxu0 0.0
        %v1040 = vand.u32 %v473, 4294901760
        %1041 = vmatpush2.msra.mxu0 %v1040
        %1042 = vmatprep.subr.mxu0 0.0
        %v1043 = vand.u32 %v472, 4294901760
        %1044 = vmatpush2.msra.mxu0 %v1043
        %1045 = vmatprep.subr.mxu0 0.0
        %v1046 = vand.u32 %v471, 4294901760
        %1047 = vmatpush2.msra.mxu0 %v1046
        %1048 = vmatprep.subr.mxu0 0.0
        %v1049 = vand.u32 %v470, 4294901760
        %1050 = vmatpush2.msra.mxu0 %v1049
        %1051 = vmatprep.subr.mxu0 0.0
        %v1052 = vand.u32 %v469, 4294901760
        %1053 = vmatpush2.msra.mxu0 %v1052
        %1054 = vmatprep.subr.mxu0 0.0
        %v1055 = vand.u32 %v468, 4294901760
        %1056 = vmatpush2.msra.mxu0 %v1055
        %1057 = vmatprep.subr.mxu0 0.0
        %v1058 = vand.u32 %v467, 4294901760
        %1059 = vmatpush2.msra.mxu0 %v1058
        %1060 = vmatprep.subr.mxu0 0.0
        %v1061 = vand.u32 %v466, 4294901760
        %1062 = vmatpush2.msra.mxu0 %v1061
        %v1063 = vand.u32 %v484, 4294901760
        %v1064 = vsub.f32 %v484, %v1063
        %v1065 = vand.u32 %v1064, 4294901760
        %1066 = vmatprep.mubr.f32.mxu0 %v1065
        %v1067 = vand.u32 %v483, 4294901760
        %v1068 = vsub.f32 %v483, %v1067
        %v1069 = vand.u32 %v1068, 4294901760
        %1070 = vmatmul.mubr.f32.gmra.mxu0 %v1069
        %v1071 = vpop.f32.mrf.mxu0
        %v1072 = vadd.f32 %v964, %v1071
        %v1073 = vpop.f32.mrf.mxu0
        %1074 = vdwg.mxu0
        %1075 = vmatprep.subr.mxu0 0.0
        %v1076 = vand.u32 %v465, 4294901760
        %v1077 = vsub.f32 %v465, %v1076
        %v1078 = vand.u32 %v1077, 4294901760
        %1079 = vmatpush1.msra.mxu0 %v1078
        %1080 = vmatprep.subr.mxu0 0.0
        %v1081 = vand.u32 %v464, 4294901760
        %v1082 = vsub.f32 %v464, %v1081
        %v1083 = vand.u32 %v1082, 4294901760
        %1084 = vmatpush1.msra.mxu0 %v1083
        %1085 = vmatprep.subr.mxu0 0.0
        %v1086 = vand.u32 %v463, 4294901760
        %v1087 = vsub.f32 %v463, %v1086
        %v1088 = vand.u32 %v1087, 4294901760
        %1089 = vmatpush1.msra.mxu0 %v1088
        %1090 = vmatprep.subr.mxu0 0.0
        %v1091 = vand.u32 %v462, 4294901760
        %v1092 = vsub.f32 %v462, %v1091
        %v1093 = vand.u32 %v1092, 4294901760
        %1094 = vmatpush1.msra.mxu0 %v1093
        %1095 = vmatprep.subr.mxu0 0.0
        %v1096 = vand.u32 %v461, 4294901760
        %v1097 = vsub.f32 %v461, %v1096
        %v1098 = vand.u32 %v1097, 4294901760
        %1099 = vmatpush1.msra.mxu0 %v1098
        %1100 = vmatprep.subr.mxu0 0.0
        %v1101 = vand.u32 %v460, 4294901760
        %v1102 = vsub.f32 %v460, %v1101
        %v1103 = vand.u32 %v1102, 4294901760
        %1104 = vmatpush1.msra.mxu0 %v1103
        %1105 = vmatprep.subr.mxu0 0.0
        %v1106 = vand.u32 %v459, 4294901760
        %v1107 = vsub.f32 %v459, %v1106
        %v1108 = vand.u32 %v1107, 4294901760
        %1109 = vmatpush1.msra.mxu0 %v1108
        %1110 = vmatprep.subr.mxu0 0.0
        %v1111 = vand.u32 %v458, 4294901760
        %v1112 = vsub.f32 %v458, %v1111
        %v1113 = vand.u32 %v1112, 4294901760
        %1114 = vmatpush1.msra.mxu0 %v1113
        %1115 = vmatprep.subr.mxu0 0.0
        %v1116 = vand.u32 %v457, 4294901760
        %v1117 = vsub.f32 %v457, %v1116
        %v1118 = vand.u32 %v1117, 4294901760
        %1119 = vmatpush1.msra.mxu0 %v1118
        %1120 = vmatprep.subr.mxu0 0.0
        %v1121 = vand.u32 %v456, 4294901760
        %v1122 = vsub.f32 %v456, %v1121
        %v1123 = vand.u32 %v1122, 4294901760
        %1124 = vmatpush1.msra.mxu0 %v1123
        %1125 = vmatprep.subr.mxu0 0.0
        %v1126 = vand.u32 %v455, 4294901760
        %v1127 = vsub.f32 %v455, %v1126
        %v1128 = vand.u32 %v1127, 4294901760
        %1129 = vmatpush1.msra.mxu0 %v1128
        %1130 = vmatprep.subr.mxu0 0.0
        %v1131 = vand.u32 %v454, 4294901760
        %v1132 = vsub.f32 %v454, %v1131
        %v1133 = vand.u32 %v1132, 4294901760
        %1134 = vmatpush1.msra.mxu0 %v1133
        %1135 = vmatprep.subr.mxu0 0.0
        %v1136 = vand.u32 %v453, 4294901760
        %v1137 = vsub.f32 %v453, %v1136
        %v1138 = vand.u32 %v1137, 4294901760
        %1139 = vmatpush1.msra.mxu0 %v1138
        %1140 = vmatprep.subr.mxu0 0.0
        %v1141 = vand.u32 %v452, 4294901760
        %v1142 = vsub.f32 %v452, %v1141
        %v1143 = vand.u32 %v1142, 4294901760
        %1144 = vmatpush1.msra.mxu0 %v1143
        %1145 = vmatprep.subr.mxu0 0.0
        %v1146 = vand.u32 %v451, 4294901760
        %v1147 = vsub.f32 %v451, %v1146
        %v1148 = vand.u32 %v1147, 4294901760
        %1149 = vmatpush1.msra.mxu0 %v1148
        %1150 = vmatprep.subr.mxu0 0.0
        %v1151 = vand.u32 %v450, 4294901760
        %v1152 = vsub.f32 %v450, %v1151
        %v1153 = vand.u32 %v1152, 4294901760
        %1154 = vmatpush1.msra.mxu0 %v1153
        %1155 = vmatprep.subr.mxu0 0.0
        %v1156 = vand.u32 %v481, 4294901760
        %v1157 = vsub.f32 %v481, %v1156
        %v1158 = vand.u32 %v1157, 4294901760
        %1159 = vmatpush2.msra.mxu0 %v1158
        %1160 = vmatprep.subr.mxu0 0.0
        %v1161 = vand.u32 %v480, 4294901760
        %v1162 = vsub.f32 %v480, %v1161
        %v1163 = vand.u32 %v1162, 4294901760
        %1164 = vmatpush2.msra.mxu0 %v1163
        %1165 = vmatprep.subr.mxu0 0.0
        %v1166 = vand.u32 %v479, 4294901760
        %v1167 = vsub.f32 %v479, %v1166
        %v1168 = vand.u32 %v1167, 4294901760
        %1169 = vmatpush2.msra.mxu0 %v1168
        %1170 = vmatprep.subr.mxu0 0.0
        %v1171 = vand.u32 %v478, 4294901760
        %v1172 = vsub.f32 %v478, %v1171
        %v1173 = vand.u32 %v1172, 4294901760
        %1174 = vmatpush2.msra.mxu0 %v1173
        %1175 = vmatprep.subr.mxu0 0.0
        %v1176 = vand.u32 %v477, 4294901760
        %v1177 = vsub.f32 %v477, %v1176
        %v1178 = vand.u32 %v1177, 4294901760
        %1179 = vmatpush2.msra.mxu0 %v1178
        %1180 = vmatprep.subr.mxu0 0.0
        %v1181 = vand.u32 %v476, 4294901760
        %v1182 = vsub.f32 %v476, %v1181
        %v1183 = vand.u32 %v1182, 4294901760
        %1184 = vmatpush2.msra.mxu0 %v1183
        %1185 = vmatprep.subr.mxu0 0.0
        %v1186 = vand.u32 %v475, 4294901760
        %v1187 = vsub.f32 %v475, %v1186
        %v1188 = vand.u32 %v1187, 4294901760
        %1189 = vmatpush2.msra.mxu0 %v1188
        %1190 = vmatprep.subr.mxu0 0.0
        %v1191 = vand.u32 %v474, 4294901760
        %v1192 = vsub.f32 %v474, %v1191
        %v1193 = vand.u32 %v1192, 4294901760
        %1194 = vmatpush2.msra.mxu0 %v1193
        %1195 = vmatprep.subr.mxu0 0.0
        %v1196 = vand.u32 %v473, 4294901760
        %v1197 = vsub.f32 %v473, %v1196
        %v1198 = vand.u32 %v1197, 4294901760
        %1199 = vmatpush2.msra.mxu0 %v1198
        %1200 = vmatprep.subr.mxu0 0.0
        %v1201 = vand.u32 %v472, 4294901760
        %v1202 = vsub.f32 %v472, %v1201
        %v1203 = vand.u32 %v1202, 4294901760
        %1204 = vmatpush2.msra.mxu0 %v1203
        %1205 = vmatprep.subr.mxu0 0.0
        %v1206 = vand.u32 %v471, 4294901760
        %v1207 = vsub.f32 %v471, %v1206
        %v1208 = vand.u32 %v1207, 4294901760
        %1209 = vmatpush2.msra.mxu0 %v1208
        %1210 = vmatprep.subr.mxu0 0.0
        %v1211 = vand.u32 %v470, 4294901760
        %v1212 = vsub.f32 %v470, %v1211
        %v1213 = vand.u32 %v1212, 4294901760
        %1214 = vmatpush2.msra.mxu0 %v1213
        %1215 = vmatprep.subr.mxu0 0.0
        %v1216 = vand.u32 %v469, 4294901760
        %v1217 = vsub.f32 %v469, %v1216
        %v1218 = vand.u32 %v1217, 4294901760
        %1219 = vmatpush2.msra.mxu0 %v1218
        %1220 = vmatprep.subr.mxu0 0.0
        %v1221 = vand.u32 %v468, 4294901760
        %v1222 = vsub.f32 %v468, %v1221
        %v1223 = vand.u32 %v1222, 4294901760
        %1224 = vmatpush2.msra.mxu0 %v1223
        %1225 = vmatprep.subr.mxu0 0.0
        %v1226 = vand.u32 %v467, 4294901760
        %v1227 = vsub.f32 %v467, %v1226
        %v1228 = vand.u32 %v1227, 4294901760
        %1229 = vmatpush2.msra.mxu0 %v1228
        %1230 = vmatprep.subr.mxu0 0.0
        %v1231 = vand.u32 %v466, 4294901760
        %v1232 = vsub.f32 %v466, %v1231
        %v1233 = vand.u32 %v1232, 4294901760
        %1234 = vmatpush2.msra.mxu0 %v1233
        %v1235 = vand.u32 %v484, 4294901760
        %1236 = vmatprep.mubr.f32.mxu0 %v1235
        %v1237 = vand.u32 %v483, 4294901760
        %1238 = vmatmul.mubr.f32.gmra.mxu0 %v1237
        %v1239 = vpop.f32.mrf.mxu0
        %v1240 = vadd.f32 %v1072, %v1239
        %v1241 = vpop.f32.mrf.mxu0
        %1242 = vdwg.mxu0
        %1243 = vmatprep.subr.mxu0 0.0
        %v1244 = vand.u32 %v465, 4294901760
        %1245 = vmatpush1.msra.mxu0 %v1244
        %1246 = vmatprep.subr.mxu0 0.0
        %v1247 = vand.u32 %v464, 4294901760
        %1248 = vmatpush1.msra.mxu0 %v1247
        %1249 = vmatprep.subr.mxu0 0.0
        %v1250 = vand.u32 %v463, 4294901760
        %1251 = vmatpush1.msra.mxu0 %v1250
        %1252 = vmatprep.subr.mxu0 0.0
        %v1253 = vand.u32 %v462, 4294901760
        %1254 = vmatpush1.msra.mxu0 %v1253
        %1255 = vmatprep.subr.mxu0 0.0
        %v1256 = vand.u32 %v461, 4294901760
        %1257 = vmatpush1.msra.mxu0 %v1256
        %1258 = vmatprep.subr.mxu0 0.0
        %v1259 = vand.u32 %v460, 4294901760
        %1260 = vmatpush1.msra.mxu0 %v1259
        %1261 = vmatprep.subr.mxu0 0.0
        %v1262 = vand.u32 %v459, 4294901760
        %1263 = vmatpush1.msra.mxu0 %v1262
        %1264 = vmatprep.subr.mxu0 0.0
        %v1265 = vand.u32 %v458, 4294901760
        %1266 = vmatpush1.msra.mxu0 %v1265
        %1267 = vmatprep.subr.mxu0 0.0
        %v1268 = vand.u32 %v457, 4294901760
        %1269 = vmatpush1.msra.mxu0 %v1268
        %1270 = vmatprep.subr.mxu0 0.0
        %v1271 = vand.u32 %v456, 4294901760
        %1272 = vmatpush1.msra.mxu0 %v1271
        %1273 = vmatprep.subr.mxu0 0.0
        %v1274 = vand.u32 %v455, 4294901760
        %1275 = vmatpush1.msra.mxu0 %v1274
        %1276 = vmatprep.subr.mxu0 0.0
        %v1277 = vand.u32 %v454, 4294901760
        %1278 = vmatpush1.msra.mxu0 %v1277
        %1279 = vmatprep.subr.mxu0 0.0
        %v1280 = vand.u32 %v453, 4294901760
        %1281 = vmatpush1.msra.mxu0 %v1280
        %1282 = vmatprep.subr.mxu0 0.0
        %v1283 = vand.u32 %v452, 4294901760
        %1284 = vmatpush1.msra.mxu0 %v1283
        %1285 = vmatprep.subr.mxu0 0.0
        %v1286 = vand.u32 %v451, 4294901760
        %1287 = vmatpush1.msra.mxu0 %v1286
        %1288 = vmatprep.subr.mxu0 0.0
        %v1289 = vand.u32 %v450, 4294901760
        %1290 = vmatpush1.msra.mxu0 %v1289
        %1291 = vmatprep.subr.mxu0 0.0
        %v1292 = vand.u32 %v481, 4294901760
        %1293 = vmatpush2.msra.mxu0 %v1292
        %1294 = vmatprep.subr.mxu0 0.0
        %v1295 = vand.u32 %v480, 4294901760
        %1296 = vmatpush2.msra.mxu0 %v1295
        %1297 = vmatprep.subr.mxu0 0.0
        %v1298 = vand.u32 %v479, 4294901760
        %1299 = vmatpush2.msra.mxu0 %v1298
        %1300 = vmatprep.subr.mxu0 0.0
        %v1301 = vand.u32 %v478, 4294901760
        %1302 = vmatpush2.msra.mxu0 %v1301
        %1303 = vmatprep.subr.mxu0 0.0
        %v1304 = vand.u32 %v477, 4294901760
        %1305 = vmatpush2.msra.mxu0 %v1304
        %1306 = vmatprep.subr.mxu0 0.0
        %v1307 = vand.u32 %v476, 4294901760
        %1308 = vmatpush2.msra.mxu0 %v1307
        %1309 = vmatprep.subr.mxu0 0.0
        %v1310 = vand.u32 %v475, 4294901760
        %1311 = vmatpush2.msra.mxu0 %v1310
        %1312 = vmatprep.subr.mxu0 0.0
        %v1313 = vand.u32 %v474, 4294901760
        %1314 = vmatpush2.msra.mxu0 %v1313
        %1315 = vmatprep.subr.mxu0 0.0
        %v1316 = vand.u32 %v473, 4294901760
        %1317 = vmatpush2.msra.mxu0 %v1316
        %1318 = vmatprep.subr.mxu0 0.0
        %v1319 = vand.u32 %v472, 4294901760
        %1320 = vmatpush2.msra.mxu0 %v1319
        %1321 = vmatprep.subr.mxu0 0.0
        %v1322 = vand.u32 %v471, 4294901760
        %1323 = vmatpush2.msra.mxu0 %v1322
        %1324 = vmatprep.subr.mxu0 0.0
        %v1325 = vand.u32 %v470, 4294901760
        %1326 = vmatpush2.msra.mxu0 %v1325
        %1327 = vmatprep.subr.mxu0 0.0
        %v1328 = vand.u32 %v469, 4294901760
        %1329 = vmatpush2.msra.mxu0 %v1328
        %1330 = vmatprep.subr.mxu0 0.0
        %v1331 = vand.u32 %v468, 4294901760
        %1332 = vmatpush2.msra.mxu0 %v1331
        %1333 = vmatprep.subr.mxu0 0.0
        %v1334 = vand.u32 %v467, 4294901760
        %1335 = vmatpush2.msra.mxu0 %v1334
        %1336 = vmatprep.subr.mxu0 0.0
        %v1337 = vand.u32 %v466, 4294901760
        %1338 = vmatpush2.msra.mxu0 %v1337
        %v1339 = vand.u32 %v484, 4294901760
        %1340 = vmatprep.mubr.f32.mxu0 %v1339
        %v1341 = vand.u32 %v483, 4294901760
        %1342 = vmatmul.mubr.f32.gmra.mxu0 %v1341
        %v1343 = vpop.f32.mrf.mxu0
        %v1344 = vadd.f32 %v1240, %v1343
        %v1345 = vpop.f32.mrf.mxu0
        %1346 = vdwg.mxu0
        %v1347 = vadd.f32 %v482, %v1344
        %vm1348 = vcmask 64512
        %1349 = vst.msk [vmem:[#allocation2] sm:$0xff] %vm1348, %v1347
        // Predicated region
        $region57: #{tpu_custom_call.1} parent=35 // pred_check
          %p1350 = pneg %p302
        $region58: #{tpu_custom_call.1} parent=35 // pred_check_branch
          %1352 = sbr.rel (%p1350) target = $region60
        $region59: #{tpu_custom_call.1} parent=35 // pred_region
          %v1353 = vld [vmem:[%s265] sm:$0xff]
          %v1354 = vld [vmem:[%s300] sm:$0x1]
          %s1355 = sld [smem:[#allocation9]]
          %v1356 = vld [vmem:[#allocation2] sm:$0xff]
          %v1357 = vsub.f32 %v1356, %v1353
          %v1358 = vand.u32 2147483647, %v1357
          %v1360 = vlaneseq
          %v1361 = vshrl.u32 %v1360, 7
          %v1362 = vsub.s32 0, %v1361
          %v1363 = vrot.slane %v1354, %v1362
          %v1365 = vmul.f32 %v1358, %v1363
          %v1366 = vsel %vm1348, %v1365, 0.0
          %1367 = vadd.xlane.f32.xlu0 %v1366
          %v1368 = vpop.xlane.xlu0 %1367
          %v1369 = vrot.slane %v1368, 4
          %v1370 = vadd.f32 %v1368, %v1369
          %v1371 = vrot.slane %v1370, 2
          %v1372 = vadd.f32 %v1370, %v1371
          %v1373 = vrot.slane %v1372, 1
          %v1374 = vadd.f32 %v1372, %v1373
          %s1375 = vtos %v1374
          %s1376 = sadd.f32 %s1355, %s1375
          %s1377 = scalar_lea.smem [#allocation9], 0
          %1378 = sst [smem:[%s1377]] %s1376
        $region60: #{tpu_custom_call.1} parent=35 // pred_fallthru
          _
        // Predicated region
        $region61: #{tpu_custom_call.1} parent=35 // pred_check
          %p1379 = pneg %p153
        $region62: #{tpu_custom_call.1} parent=35 // pred_check_branch
          %1381 = sbr.rel (%p1379) target = $region64
        $region63: #{tpu_custom_call.1} parent=35 // pred_region
          %s1383 = ssub.s32 16, 16
          %1384 = vsyncadd [#allocation5], %s1383
          %1387 = dma.smem_to_hbm [#allocation9], 16, %s4, [#allocation5]
        $region64: #{tpu_custom_call.1} parent=35 // pred_fallthru
          _
        // Predicated region
        $region65: #{tpu_custom_call.1} parent=35 // pred_check
          %p1388 = pneg %p153
        $region66: #{tpu_custom_call.1} parent=35 // pred_check_branch
          %1390 = sbr.rel (%p1388) target = $region68
        $region67: #{tpu_custom_call.1} parent=35 // pred_region
          %1391 = dma.done [#allocation5], 16
        $region68: #{tpu_custom_call.1} parent=35 // pred_fallthru
          _
        %1392 = sfence
      $region36: #{tpu_custom_call.1} parent=5 // pred_fallthru
        _
      %p1393 = scmp.le.s32.totalorder 2, %s17
      // Predicated region
      $region69: #{tpu_custom_call.1} parent=5 // pred_check
        %p1394 = pneg %p1393
      $region70: #{tpu_custom_call.1} parent=5 // pred_check_branch
        %1396 = sbr.rel (%p1394) target = $region72
      $region71: #{tpu_custom_call.1} parent=5 // pred_region
        %s1397 = ssub.s32 %s17, 2
      $region72: #{tpu_custom_call.1} parent=5 // pred_fallthru
        _
    $region6: #{tpu_custom_call.1} parent=1 // loop_footer
      %s21 = sadd.s32 1, %s17
    $region7: #{tpu_custom_call.1} parent=1 // loop_footer_branch
      %16 = sbr.rel target = $region3
    $region8: #{tpu_custom_call.1} parent=1 // loop_exit
      _
    %1398 = vsyncpa [#allocation4], 1
    %s1399 = scalar_lea.sflag [#allocation4], 1
    %1400 = vsyncpa %s1399, 1
    %1401 = vsyncpa [#allocation7], 1
    %s1402 = scalar_lea.sflag [#allocation7], 1
    %1403 = vsyncpa %s1402, 1
    %1404 = vsyncpa [#allocation5], 1
    %s1405 = scalar_lea.sflag [#allocation5], 1
    %1406 = vsyncpa %s1405, 1

</llo_original>
